<compile_context>
chip_gen: v5e
topology: v5e:2x2
jax: 0.10.0
libtpu: 0.0.40
codegen_flags: <defaults>
</compile_context>

<pallas_src>
import jax
import jax.numpy as jnp
from jax.experimental import pallas as pl
from jax.experimental.pallas import tpu as pltpu


def _round_up(v: int, m: int) -> int:
    return ((v + m - 1) // m) * m


def _linear_kernel(x_ref, w_ref, b_ref, o_ref):
    # x: (TILE_M, K_pad), w: (K_pad, N_pad), b: (1, N_pad), o: (TILE_M, N_pad)
    y = jnp.dot(x_ref[...], w_ref[...], preferred_element_type=jnp.float32)
    o_ref[...] = (y + b_ref[...]).astype(o_ref.dtype)


def simple_classifier(x, weight, bias, *, tile_m: int = 256):
    """x: (..., in_features) f32; weight: (out_features, in_features); bias: (out_features,).

    Returns (..., out_features), matching torch.nn.Linear forward.
    """
    orig_shape = x.shape
    in_features = orig_shape[-1]
    out_features = weight.shape[0]

    # Flatten leading dims into a single row dimension M.
    x2d = x.reshape(-1, in_features).astype(jnp.float32)
    M, K = x2d.shape
    N = out_features

    # Lane-dense padding: K and N up to multiples of 128; M tiled in TILE_M rows.
    K_pad = _round_up(K, 128)
    N_pad = _round_up(N, 128)
    TILE_M = min(tile_m, _round_up(M, 8))
    M_pad = _round_up(M, TILE_M)

    x_p = jnp.zeros((M_pad, K_pad), jnp.float32).at[:M, :K].set(x2d)
    # (out, in) -> (K_pad, N_pad)
    w_p = jnp.zeros((K_pad, N_pad), jnp.float32).at[:K, :N].set(
        weight.astype(jnp.float32).T)
    b_p = jnp.zeros((1, N_pad), jnp.float32).at[0, :N].set(
        bias.astype(jnp.float32))

    grid = (M_pad // TILE_M,)
    out_p = pl.pallas_call(
        _linear_kernel,
        out_shape=jax.ShapeDtypeStruct((M_pad, N_pad), jnp.float32),
        grid=grid,
        in_specs=[
            pl.BlockSpec((TILE_M, K_pad), lambda i: (i, 0)),   # row tile of x
            pl.BlockSpec((K_pad, N_pad), lambda i: (0, 0)),    # full weight
            pl.BlockSpec((1, N_pad), lambda i: (0, 0)),        # bias row
        ],
        out_specs=pl.BlockSpec((TILE_M, N_pad), lambda i: (i, 0)),
        compiler_params=pltpu.CompilerParams(
            dimension_semantics=("parallel",)),
    )(x_p, w_p, b_p)

    out = out_p[:M, :N]
    return out.reshape(*orig_shape[:-1], out_features)


if __name__ == "__main__":
    key = jax.random.PRNGKey(0)
    k_x, k_w, k_b = jax.random.split(key, 3)

    batch, in_features, out_features = 2, 32, 8

    x = jax.random.normal(k_x, (batch, in_features), dtype=jnp.float32)
    # PyTorch Linear default init is uniform(-1/sqrt(in), 1/sqrt(in)); exact
    # init distribution does not affect forward semantics — use scaled normals.
    weight = 0.1 * jax.random.normal(k_w, (out_features, in_features),
                                     dtype=jnp.float32)
    bias = 0.1 * jax.random.normal(k_b, (out_features,), dtype=jnp.float32)

    out = simple_classifier(x, weight, bias)
    jax.block_until_ready(out)
    assert out.shape == (batch, out_features), out.shape

    # Correctness check against plain JAX reference (same math as torch Linear).
    ref = x @ weight.T + bias
    assert jnp.max(jnp.abs(out - ref)) < 1e-4, float(jnp.max(jnp.abs(out - ref)))

    print("KERNEL_OK")
</pallas_src>

<mosaic_0001>
module attributes {stable_mosaic.version = 11 : i64} {
  func.func @_linear_kernel(%arg0: i32, %arg1: memref<8x128xf32, #tpu.memory_space<vmem>>, %arg2: memref<128x128xf32, #tpu.memory_space<vmem>>, %arg3: memref<1x128xf32, #tpu.memory_space<vmem>>, %arg4: memref<8x128xf32, #tpu.memory_space<vmem>>) attributes {dimension_semantics = [#tpu.dimension_semantics<parallel>], iteration_bounds = array<i64: 1>, scalar_prefetch = 0 : i64, scratch_operands = 0 : i64, tpu.core_type = #tpu.core_type<tc>, window_params = [{transform_indices = @transform_0, window_bounds = array<i64: 8, 128>}, {pipeline_mode = #tpu.pipeline_mode<synchronous>, transform_indices = @transform_1, window_bounds = array<i64: 128, 128>}, {pipeline_mode = #tpu.pipeline_mode<synchronous>, transform_indices = @transform_2, window_bounds = array<i64: 1, 128>}, {transform_indices = @transform_3, window_bounds = array<i64: 8, 128>}]} {
    %c0 = arith.constant 0 : index
    %c0_0 = arith.constant 0 : index
    %0 = vector.load %arg1[%c0, %c0_0] : memref<8x128xf32, #tpu.memory_space<vmem>>, vector<8x128xf32>
    %c0_1 = arith.constant 0 : index
    %c0_2 = arith.constant 0 : index
    %1 = vector.load %arg2[%c0_1, %c0_2] : memref<128x128xf32, #tpu.memory_space<vmem>>, vector<128x128xf32>
    %cst = arith.constant dense<0.000000e+00> : vector<8x128xf32>
    %2 = tpu.matmul %0, %1, %cst {dimension_numbers = #tpu.dot_dimension_numbers<[1], [0], [0], [1], [0, 0, 1, 1], [], []>} : vector<8x128xf32>, vector<128x128xf32>, vector<8x128xf32> -> vector<8x128xf32>
    %c0_3 = arith.constant 0 : index
    %c0_4 = arith.constant 0 : index
    %3 = vector.load %arg3[%c0_3, %c0_4] : memref<1x128xf32, #tpu.memory_space<vmem>>, vector<1x128xf32>
    %4 = vector.broadcast %3 : vector<1x128xf32> to vector<8x128xf32>
    %5 = arith.addf %2, %4 : vector<8x128xf32>
    %c0_5 = arith.constant 0 : index
    %c0_6 = arith.constant 0 : index
    %6 = vector.load %arg4[%c0_5, %c0_6] : memref<8x128xf32, #tpu.memory_space<vmem>>, vector<8x128xf32>
    tpu.vector_store %arg4[%c0_5, %c0_6], %5 {strides = array<i32>} : memref<8x128xf32, #tpu.memory_space<vmem>>, vector<8x128xf32>,
    return
  }
  func.func @transform_0(%arg0: i32) -> (i32, i32) {
    %c0_i32 = arith.constant 0 : i32
    %c0_i32_0 = arith.constant 0 : i32
    return %arg0, %c0_i32 : i32, i32
  }
  func.func @transform_1(%arg0: i32) -> (i32, i32) {
    %c0_i32 = arith.constant 0 : i32
    %c0_i32_0 = arith.constant 0 : i32
    %c0_i32_1 = arith.constant 0 : i32
    return %c0_i32, %c0_i32_0 : i32, i32
  }
  func.func @transform_2(%arg0: i32) -> (i32, i32) {
    %c0_i32 = arith.constant 0 : i32
    %c0_i32_0 = arith.constant 0 : i32
    %c0_i32_1 = arith.constant 0 : i32
    return %c0_i32, %c0_i32_0 : i32, i32
  }
  func.func @transform_3(%arg0: i32) -> (i32, i32) {
    %c0_i32 = arith.constant 0 : i32
    %c0_i32_0 = arith.constant 0 : i32
    return %arg0, %c0_i32 : i32, i32
  }
}

</mosaic_0001>

<llo_original>
// kernel: tpu_custom_call.1
$region0: #{tpu_custom_call.1}
  #allocation0 [shape = 'u32[]', space=smem, size = 0x4, offset = 0x4, fixed_abs, tag = 'smem constant byte address 0x4 - core index']
  #allocation1 [shape = 'u32[72,128]{1,0:T(1,128)}', space=vmem, size = 0x9000, scoped, tag = 'internal scratch']
  %s0 = inlined_call_operand.hbm [shape: f32[8,128], index: 0, kind: input, shape index: {}]
  %s1 = inlined_call_operand.hbm [shape: f32[128,128], index: 1, kind: input, shape index: {}]
  %s2 = inlined_call_operand.vmem [shape: f32[1,128], index: 2, kind: input, shape index: {}]
  %s3 = inlined_call_operand.hbm [shape: f32[8,128], index: 3, kind: output, shape index: {}]
  %s4 = sld [smem:[#allocation0]]
  $region30: #{tpu_custom_call.1} parent=0
    _
  %s6 = ssub.s32 1, %s4
  %s7 = scalar_select 0, %s6, %s4
  $region1: #{tpu_custom_call.1} parent=0
    #allocation2 [shape = 'u8[4096]{0}', space=vmem, size = 0x1000, scoped, tag = 'input window, operand 0, single buffered']
    #allocation3 [shape = 's32[1]{0}', space=sflag, size = 0x4, scoped, tag = 'scoped memory for tpu_custom_call.1']
    #allocation4 [shape = 's32[1]{0}', space=sflag, size = 0x4, scoped, tag = 'scoped memory for tpu_custom_call.1']
    #allocation5 [shape = 'u8[65536]{0}', space=vmem, size = 0x10000, scoped, tag = 'input window, operand 1, single buffered']
    #allocation6 [shape = 's32[1]{0}', space=sflag, size = 0x4, scoped, tag = 'scoped memory for tpu_custom_call.1']
    #allocation7 [shape = 'u8[4096]{0}', space=vmem, size = 0x1000, scoped, tag = 'output window, operand 0, single buffered']
    %8 = vsyncpa [#allocation3], 0
    %9 = vsyncpa [#allocation6], 0
    %10 = vsyncpa [#allocation4], 0
    // Predicated region
    $region2: #{tpu_custom_call.1} parent=1 // pred_check
      _
    $region3: #{tpu_custom_call.1} parent=1 // pred_check_branch
      %12 = sbr.rel (0) target = $region5
    $region4: #{tpu_custom_call.1} parent=1 // pred_region
      %14 = vsyncadd [#allocation3], 0
      %s16 = sshll.u32 %s0, 4
      %s17 = int_to_ptr.hbm [resolvable:$true] %s16
      %s18 = sshll.u32 [#allocation2], 4
      %s19 = int_to_ptr.vmem [resolvable:$true] %s18
      %21 = dma.hbm_to_vmem [thread:$0]  %s17, 128, %s19, [#allocation3]
    $region5: #{tpu_custom_call.1} parent=1 // pred_fallthru
      _
    // Predicated region
    $region6: #{tpu_custom_call.1} parent=1 // pred_check
      _
    $region7: #{tpu_custom_call.1} parent=1 // pred_check_branch
      %23 = sbr.rel (0) target = $region9
    $region8: #{tpu_custom_call.1} parent=1 // pred_region
      %25 = vsyncadd [#allocation6], 0
      %s26 = sshll.u32 %s1, 4
      %s27 = int_to_ptr.hbm [resolvable:$true] %s26
      %s28 = sshll.u32 [#allocation5], 4
      %s29 = int_to_ptr.vmem [resolvable:$true] %s28
      %34 = dma.hbm_to_vmem [thread:$0]  %s27, 2048, %s29, [#allocation6], 128, 128, 8
    $region9: #{tpu_custom_call.1} parent=1 // pred_fallthru
      _
    // Predicated region
    $region10: #{tpu_custom_call.1} parent=1 // pred_check
      _
    $region11: #{tpu_custom_call.1} parent=1 // pred_check_branch
      %36 = sbr.rel (0) target = $region13
    $region12: #{tpu_custom_call.1} parent=1 // pred_region
      _
    $region13: #{tpu_custom_call.1} parent=1 // pred_fallthru
      _
    // Predicated region
    $region14: #{tpu_custom_call.1} parent=1 // pred_check
      _
    $region15: #{tpu_custom_call.1} parent=1 // pred_check_branch
      %38 = sbr.rel (0) target = $region17
    $region16: #{tpu_custom_call.1} parent=1 // pred_region
      %40 = dma.done [#allocation3], 128
    $region17: #{tpu_custom_call.1} parent=1 // pred_fallthru
      _
    // Predicated region
    $region18: #{tpu_custom_call.1} parent=1 // pred_check
      _
    $region19: #{tpu_custom_call.1} parent=1 // pred_check_branch
      %42 = sbr.rel (0) target = $region21
    $region20: #{tpu_custom_call.1} parent=1 // pred_region
      %44 = dma.done [#allocation6], 2048
    $region21: #{tpu_custom_call.1} parent=1 // pred_fallthru
      _
    %v45 = vld [vmem:[#allocation2] sm:$0xff]
    %v46 = vld [vmem:[#allocation5] sm:$0xff]
    %v47 = vld [vmem:[#allocation5 + $0x8] sm:$0xff]
    %v48 = vld [vmem:[#allocation5 + $0x10] sm:$0xff]
    %v49 = vld [vmem:[#allocation5 + $0x18] sm:$0xff]
    %v50 = vld [vmem:[#allocation5 + $0x20] sm:$0xff]
    %v51 = vld [vmem:[#allocation5 + $0x28] sm:$0xff]
    %v52 = vld [vmem:[#allocation5 + $0x30] sm:$0xff]
    %v53 = vld [vmem:[#allocation5 + $0x38] sm:$0xff]
    %v54 = vld [vmem:[#allocation5 + $0x40] sm:$0xff]
    %v55 = vld [vmem:[#allocation5 + $0x48] sm:$0xff]
    %v56 = vld [vmem:[#allocation5 + $0x50] sm:$0xff]
    %v57 = vld [vmem:[#allocation5 + $0x58] sm:$0xff]
    %v58 = vld [vmem:[#allocation5 + $0x60] sm:$0xff]
    %v59 = vld [vmem:[#allocation5 + $0x68] sm:$0xff]
    %v60 = vld [vmem:[#allocation5 + $0x70] sm:$0xff]
    %v61 = vld [vmem:[#allocation5 + $0x78] sm:$0xff]
    %v62 = vld [vmem:[%s2] sm:$0x1]
    %v64 = vperm.slane %v62, 0
    %66 = vmatpush.msra.mxu0 %v61
    %67 = vmatpush.msra.mxu0 %v60
    %68 = vmatpush.msra.mxu0 %v59
    %69 = vmatpush.msra.mxu0 %v58
    %70 = vmatpush.msra.mxu0 %v57
    %71 = vmatpush.msra.mxu0 %v56
    %72 = vmatpush.msra.mxu0 %v55
    %73 = vmatpush.msra.mxu0 %v54
    %74 = vmatpush.msra.mxu0 %v53
    %75 = vmatpush.msra.mxu0 %v52
    %76 = vmatpush.msra.mxu0 %v51
    %77 = vmatpush.msra.mxu0 %v50
    %78 = vmatpush.msra.mxu0 %v49
    %79 = vmatpush.msra.mxu0 %v48
    %80 = vmatpush.msra.mxu0 %v47
    %81 = vmatpush.msra.mxu0 %v46
    %82 = vmatmul.f32.gmra.mxu0 %v45
    %v83 = vpop.f32.mrf.mxu0
    %v84 = vadd.f32 %v64, %v83
    %85 = vdwg.mxu0
    %86 = vst [vmem:[#allocation7] sm:$0xff] %v84
    // Predicated region
    $region22: #{tpu_custom_call.1} parent=1 // pred_check
      _
    $region23: #{tpu_custom_call.1} parent=1 // pred_check_branch
      %88 = sbr.rel (0) target = $region25
    $region24: #{tpu_custom_call.1} parent=1 // pred_region
      %90 = vsyncadd [#allocation4], 0
      %s92 = sshll.u32 [#allocation7], 4
      %s93 = int_to_ptr.vmem [resolvable:$true] %s92
      %s94 = sshll.u32 %s3, 4
      %s95 = int_to_ptr.hbm [resolvable:$true] %s94
      %97 = dma.vmem_to_hbm [thread:$0]  %s93, 128, %s95, [#allocation4]
    $region25: #{tpu_custom_call.1} parent=1 // pred_fallthru
      _
    // Predicated region
    $region26: #{tpu_custom_call.1} parent=1 // pred_check
      _
    $region27: #{tpu_custom_call.1} parent=1 // pred_check_branch
      %99 = sbr.rel (0) target = $region29
    $region28: #{tpu_custom_call.1} parent=1 // pred_region
      %101 = dma.done [#allocation4], 128
    $region29: #{tpu_custom_call.1} parent=1 // pred_fallthru
      _
    %102 = vsyncpa [#allocation3], 1
    %103 = vsyncpa [#allocation6], 1
    %104 = vsyncpa [#allocation4], 1

</llo_original>
